<compile_context>
chip_gen: v7x
topology: tpu7x:2x2x1
jax: 0.10.0
libtpu: 0.0.40
codegen_flags: <defaults>
</compile_context>

<pallas_src>
import jax
import jax.numpy as jnp
from jax.experimental import pallas as pl
from jax.experimental.pallas import tpu as pltpu

H1 = 100        # logical hidden sizes (PyTorch spec)
H2 = 200
H1_PAD = 128    # lane-aligned padded sizes used by the kernel
H2_PAD = 256
LANE = 128
SUBLANE = 8
TB_MAX = 512    # max batch-tile rows


def _round_up(x, m):
    return (x + m - 1) // m * m


def _cdiv(a, b):
    return (a + b - 1) // b


def _pick_tiling(batch):
    """Tile-fit the batch: minimal sublane-aligned padding, >=2 tiles when
    possible so v7x's two TensorCores both get work."""
    pad8 = _round_up(batch, SUBLANE)
    num_tiles = _cdiv(pad8, TB_MAX)
    if pad8 >= 2 * SUBLANE:
        num_tiles = max(num_tiles, 2)
    tb = _round_up(_cdiv(batch, num_tiles), SUBLANE)
    pad_batch = num_tiles * tb
    return tb, pad_batch, num_tiles


def mlp_kernel(x_ref, w1_ref, b1_ref, w2_ref, b2_ref, w3_ref, b3_ref, out_ref):
    # Fused 3-layer MLP on one batch tile. Weights are bf16 + VMEM-resident,
    # activations are cast to bf16 at each MXU input, accumulation and the
    # bias/ReLU epilogues stay f32, and the final store is a lane-dense bf16
    # slab (unmasked vst, half the f32 writeback bytes).
    x = x_ref[...].astype(jnp.bfloat16)
    h1 = jnp.dot(x, w1_ref[...], preferred_element_type=jnp.float32) + b1_ref[...]
    h1 = jnp.maximum(h1, 0.0).astype(jnp.bfloat16)
    h2 = jnp.dot(h1, w2_ref[...], preferred_element_type=jnp.float32) + b2_ref[...]
    h2 = jnp.maximum(h2, 0.0).astype(jnp.bfloat16)
    out = jnp.dot(h2, w3_ref[...], preferred_element_type=jnp.float32) + b3_ref[...]
    out_ref[...] = out.astype(out_ref.dtype)


def network_forward(x, params, out_dim):
    """x: (batch, input_dim) f32. params: padded weights from init_params.
    out_dim is a static Python int (kept out of the params pytree)."""
    w1, b1 = params["w1"], params["b1"]
    w2, b2 = params["w2"], params["b2"]
    w3, b3 = params["w3"], params["b3"]

    batch, input_dim = x.shape
    out_pad = w3.shape[1]  # lane-aligned output slab width (multiple of 128)

    tb, pad_batch, num_tiles = _pick_tiling(batch)
    if pad_batch != batch:
        x = jnp.pad(x, ((0, pad_batch - batch), (0, 0)))

    grid = (num_tiles,)

    flops = 2 * pad_batch * (input_dim * H1_PAD + H1_PAD * H2_PAD + H2_PAD * out_pad)
    bytes_accessed = (4 * pad_batch * input_dim                      # x (f32)
                      + 2 * (w1.size + w2.size + w3.size)            # weights (bf16)
                      + 4 * (b1.size + b2.size + b3.size)            # biases (f32)
                      + 2 * pad_batch * out_pad)                     # out (bf16)

    resident = lambda shape: pl.BlockSpec(shape, lambda i: (0, 0))

    out = pl.pallas_call(
        mlp_kernel,
        out_shape=jax.ShapeDtypeStruct((pad_batch, out_pad), jnp.bfloat16),
        grid=grid,
        in_specs=[
            pl.BlockSpec((tb, input_dim), lambda i: (i, 0)),   # x tile, pipelined
            resident(w1.shape), resident(b1.shape),            # weights stay put
            resident(w2.shape), resident(b2.shape),
            resident(w3.shape), resident(b3.shape),
        ],
        out_specs=pl.BlockSpec((tb, out_pad), lambda i: (i, 0)),
        compiler_params=pltpu.CompilerParams(
            dimension_semantics=("parallel",)),
        cost_estimate=pl.CostEstimate(
            flops=flops, transcendentals=0, bytes_accessed=bytes_accessed),
    )(x, w1, b1, w2, b2, w3, b3)

    # Slice back to the logical (batch, out_dim) and restore f32 interface.
    return out[:batch, :out_dim].astype(jnp.float32)


def init_params(key, input_dim, output_dim):
    """PyTorch-Linear-style init U(-1/sqrt(fan_in), 1/sqrt(fan_in)), stored
    zero-padded to lane-aligned shapes. Weights are kept in bf16 (MXU-native,
    half the DMA); biases stay f32 for the f32 epilogue."""
    def linear(key, fan_in, fan_out, fan_in_pad, fan_out_pad):
        kw, kb = jax.random.split(key)
        bound = 1.0 / jnp.sqrt(jnp.float32(fan_in))
        w = jax.random.uniform(kw, (fan_in, fan_out), jnp.float32, -bound, bound)
        b = jax.random.uniform(kb, (1, fan_out), jnp.float32, -bound, bound)
        w_pad = jnp.zeros((fan_in_pad, fan_out_pad), jnp.float32)
        w_pad = w_pad.at[:fan_in, :fan_out].set(w).astype(jnp.bfloat16)
        b_pad = jnp.zeros((1, fan_out_pad), jnp.float32)
        b_pad = b_pad.at[:, :fan_out].set(b)
        return w_pad, b_pad

    out_pad = _round_up(output_dim, LANE)
    k1, k2, k3 = jax.random.split(key, 3)
    w1, b1 = linear(k1, input_dim, H1, input_dim, H1_PAD)
    w2, b2 = linear(k2, H1, H2, H1_PAD, H2_PAD)
    w3, b3 = linear(k3, H2, output_dim, H2_PAD, out_pad)
    return {"w1": w1, "b1": b1, "w2": w2, "b2": b2, "w3": w3, "b3": b3}


def network_forward_ref(x, p, out_dim):
    """Pure-JAX f32 reference using only the logical (unpadded) weight blocks."""
    w1, b1 = p["w1"].astype(jnp.float32)[:, :H1], p["b1"][:, :H1]
    w2, b2 = p["w2"].astype(jnp.float32)[:H1, :H2], p["b2"][:, :H2]
    w3, b3 = p["w3"].astype(jnp.float32)[:H2, :out_dim], p["b3"][:, :out_dim]
    h1 = jnp.maximum(x @ w1 + b1, 0.0)
    h2 = jnp.maximum(h1 @ w2 + b2, 0.0)
    return h2 @ w3 + b3


if __name__ == "__main__":
    key = jax.random.PRNGKey(0)
    k_params, k_x1, k_x2 = jax.random.split(key, 3)

    input_dim, output_dim = 16, 8
    params = init_params(k_params, input_dim, output_dim)

    # bf16 MXU operands vs. f32 reference -> relaxed tolerance.
    ATOL = RTOL = 2e-2

    # Tiny inference-sized batch (single 8-row tile).
    batch = 2
    x = jax.random.normal(k_x1, (batch, input_dim), jnp.float32)
    out = jax.block_until_ready(network_forward(x, params, output_dim))
    ref = network_forward_ref(x, params, output_dim)
    assert out.shape == (batch, output_dim)
    assert jnp.allclose(out, ref, atol=ATOL, rtol=RTOL), "Pallas mismatch (small batch)"

    # Replay-buffer-sized batch exercising the multi-tile (2 x 152) grid path.
    batch_big = 300
    x_big = jax.random.normal(k_x2, (batch_big, input_dim), jnp.float32)
    out_big = jax.block_until_ready(network_forward(x_big, params, output_dim))
    ref_big = network_forward_ref(x_big, params, output_dim)
    assert out_big.shape == (batch_big, output_dim)
    assert jnp.allclose(out_big, ref_big, atol=ATOL, rtol=RTOL), "Pallas mismatch (big batch)"

    print("KERNEL_OK")
</pallas_src>

<mosaic_0001>
module attributes {stable_mosaic.version = 11 : i64} {
  func.func @mlp_kernel(%arg0: i32, %arg1: memref<8x16xf32, #tpu.memory_space<vmem>>, %arg2: memref<16x128xbf16, #tpu.memory_space<vmem>>, %arg3: memref<1x128xf32, #tpu.memory_space<vmem>>, %arg4: memref<128x256xbf16, #tpu.memory_space<vmem>>, %arg5: memref<1x256xf32, #tpu.memory_space<vmem>>, %arg6: memref<256x128xbf16, #tpu.memory_space<vmem>>, %arg7: memref<1x128xf32, #tpu.memory_space<vmem>>, %arg8: memref<8x128xbf16, #tpu.memory_space<vmem>>) attributes {dimension_semantics = [#tpu.dimension_semantics<parallel>], iteration_bounds = array<i64: 1>, scalar_prefetch = 0 : i64, scratch_operands = 0 : i64, tpu.core_type = #tpu.core_type<tc>, window_params = [{transform_indices = @transform_0, window_bounds = array<i64: 8, 16>}, {pipeline_mode = #tpu.pipeline_mode<synchronous>, transform_indices = @transform_1, window_bounds = array<i64: 16, 128>}, {pipeline_mode = #tpu.pipeline_mode<synchronous>, transform_indices = @transform_2, window_bounds = array<i64: 1, 128>}, {pipeline_mode = #tpu.pipeline_mode<synchronous>, transform_indices = @transform_3, window_bounds = array<i64: 128, 256>}, {pipeline_mode = #tpu.pipeline_mode<synchronous>, transform_indices = @transform_4, window_bounds = array<i64: 1, 256>}, {pipeline_mode = #tpu.pipeline_mode<synchronous>, transform_indices = @transform_5, window_bounds = array<i64: 256, 128>}, {pipeline_mode = #tpu.pipeline_mode<synchronous>, transform_indices = @transform_6, window_bounds = array<i64: 1, 128>}, {transform_indices = @transform_7, window_bounds = array<i64: 8, 128>}]} {
    %c0 = arith.constant 0 : index
    %c0_0 = arith.constant 0 : index
    %0 = vector.load %arg1[%c0, %c0_0] : memref<8x16xf32, #tpu.memory_space<vmem>>, vector<8x16xf32>
    %1 = arith.truncf %0 : vector<8x16xf32> to vector<8x16xbf16>
    %c0_1 = arith.constant 0 : index
    %c0_2 = arith.constant 0 : index
    %2 = vector.load %arg2[%c0_1, %c0_2] : memref<16x128xbf16, #tpu.memory_space<vmem>>, vector<16x128xbf16>
    %cst = arith.constant dense<0.000000e+00> : vector<8x128xf32>
    %3 = tpu.matmul %1, %2, %cst {dimension_numbers = #tpu.dot_dimension_numbers<[1], [0], [0], [1], [0, 0, 1, 1], [], []>} : vector<8x16xbf16>, vector<16x128xbf16>, vector<8x128xf32> -> vector<8x128xf32>
    %c0_3 = arith.constant 0 : index
    %c0_4 = arith.constant 0 : index
    %4 = vector.load %arg3[%c0_3, %c0_4] : memref<1x128xf32, #tpu.memory_space<vmem>>, vector<1x128xf32>
    %5 = vector.broadcast %4 : vector<1x128xf32> to vector<8x128xf32>
    %6 = arith.addf %3, %5 : vector<8x128xf32>
    %cst_5 = arith.constant 0.000000e+00 : f32
    %7 = vector.broadcast %cst_5 : f32 to vector<8x128xf32>
    %8 = arith.maximumf %6, %7 : vector<8x128xf32>
    %9 = arith.truncf %8 : vector<8x128xf32> to vector<8x128xbf16>
    %c0_6 = arith.constant 0 : index
    %c0_7 = arith.constant 0 : index
    %10 = vector.load %arg4[%c0_6, %c0_7] : memref<128x256xbf16, #tpu.memory_space<vmem>>, vector<128x256xbf16>
    %cst_8 = arith.constant dense<0.000000e+00> : vector<8x256xf32>
    %11 = tpu.matmul %9, %10, %cst_8 {dimension_numbers = #tpu.dot_dimension_numbers<[1], [0], [0], [1], [0, 0, 1, 1], [], []>} : vector<8x128xbf16>, vector<128x256xbf16>, vector<8x256xf32> -> vector<8x256xf32>
    %c0_9 = arith.constant 0 : index
    %c0_10 = arith.constant 0 : index
    %12 = vector.load %arg5[%c0_9, %c0_10] : memref<1x256xf32, #tpu.memory_space<vmem>>, vector<1x256xf32>
    %13 = vector.broadcast %12 : vector<1x256xf32> to vector<8x256xf32>
    %14 = arith.addf %11, %13 : vector<8x256xf32>
    %cst_11 = arith.constant 0.000000e+00 : f32
    %15 = vector.broadcast %cst_11 : f32 to vector<8x256xf32>
    %16 = arith.maximumf %14, %15 : vector<8x256xf32>
    %17 = arith.truncf %16 : vector<8x256xf32> to vector<8x256xbf16>
    %c0_12 = arith.constant 0 : index
    %c0_13 = arith.constant 0 : index
    %18 = vector.load %arg6[%c0_12, %c0_13] : memref<256x128xbf16, #tpu.memory_space<vmem>>, vector<256x128xbf16>
    %cst_14 = arith.constant dense<0.000000e+00> : vector<8x128xf32>
    %19 = tpu.matmul %17, %18, %cst_14 {dimension_numbers = #tpu.dot_dimension_numbers<[1], [0], [0], [1], [0, 0, 1, 1], [], []>} : vector<8x256xbf16>, vector<256x128xbf16>, vector<8x128xf32> -> vector<8x128xf32>
    %c0_15 = arith.constant 0 : index
    %c0_16 = arith.constant 0 : index
    %20 = vector.load %arg7[%c0_15, %c0_16] : memref<1x128xf32, #tpu.memory_space<vmem>>, vector<1x128xf32>
    %21 = vector.broadcast %20 : vector<1x128xf32> to vector<8x128xf32>
    %22 = arith.addf %19, %21 : vector<8x128xf32>
    %23 = arith.truncf %22 : vector<8x128xf32> to vector<8x128xbf16>
    %c0_17 = arith.constant 0 : index
    %c0_18 = arith.constant 0 : index
    %24 = vector.load %arg8[%c0_17, %c0_18] : memref<8x128xbf16, #tpu.memory_space<vmem>>, vector<8x128xbf16>
    tpu.vector_store %arg8[%c0_17, %c0_18], %23 {strides = array<i32>} : memref<8x128xbf16, #tpu.memory_space<vmem>>, vector<8x128xbf16>,
    return
  }
  func.func @transform_0(%arg0: i32) -> (i32, i32) {
    %c0_i32 = arith.constant 0 : i32
    %c0_i32_0 = arith.constant 0 : i32
    return %arg0, %c0_i32 : i32, i32
  }
  func.func @transform_1(%arg0: i32) -> (i32, i32) {
    %c0_i32 = arith.constant 0 : i32
    %c0_i32_0 = arith.constant 0 : i32
    %c0_i32_1 = arith.constant 0 : i32
    return %c0_i32, %c0_i32_0 : i32, i32
  }
  func.func @transform_2(%arg0: i32) -> (i32, i32) {
    %c0_i32 = arith.constant 0 : i32
    %c0_i32_0 = arith.constant 0 : i32
    %c0_i32_1 = arith.constant 0 : i32
    return %c0_i32, %c0_i32_0 : i32, i32
  }
  func.func @transform_3(%arg0: i32) -> (i32, i32) {
    %c0_i32 = arith.constant 0 : i32
    %c0_i32_0 = arith.constant 0 : i32
    %c0_i32_1 = arith.constant 0 : i32
    return %c0_i32, %c0_i32_0 : i32, i32
  }
  func.func @transform_4(%arg0: i32) -> (i32, i32) {
    %c0_i32 = arith.constant 0 : i32
    %c0_i32_0 = arith.constant 0 : i32
    %c0_i32_1 = arith.constant 0 : i32
    return %c0_i32, %c0_i32_0 : i32, i32
  }
  func.func @transform_5(%arg0: i32) -> (i32, i32) {
    %c0_i32 = arith.constant 0 : i32
    %c0_i32_0 = arith.constant 0 : i32
    %c0_i32_1 = arith.constant 0 : i32
    return %c0_i32, %c0_i32_0 : i32, i32
  }
  func.func @transform_6(%arg0: i32) -> (i32, i32) {
    %c0_i32 = arith.constant 0 : i32
    %c0_i32_0 = arith.constant 0 : i32
    %c0_i32_1 = arith.constant 0 : i32
    return %c0_i32, %c0_i32_0 : i32, i32
  }
  func.func @transform_7(%arg0: i32) -> (i32, i32) {
    %c0_i32 = arith.constant 0 : i32
    %c0_i32_0 = arith.constant 0 : i32
    return %arg0, %c0_i32 : i32, i32
  }
}

</mosaic_0001>

<llo_original>
// kernel: tpu_custom_call.1
$region0: #{tpu_custom_call.1}
  #allocation0 [shape = 'u32[]', space=smem, size = 0x4, offset = 0x4, fixed_abs, tag = 'smem constant byte address 0x4 - core index']
  #allocation1 [shape = 'u32[144,128]{1,0:T(1,128)}', space=vmem, size = 0x12000, scoped, tag = 'internal scratch']
  %s0 = inlined_call_operand.hbm [shape: f32[8,16], index: 0, kind: input, shape index: {}]
  %s1 = inlined_call_operand.hbm [shape: bf16[16,128], index: 1, kind: input, shape index: {}]
  %s2 = inlined_call_operand.vmem [shape: f32[1,128], index: 2, kind: input, shape index: {}]
  %s3 = inlined_call_operand.hbm [shape: bf16[128,256], index: 3, kind: input, shape index: {}]
  %s4 = inlined_call_operand.vmem [shape: f32[1,256], index: 4, kind: input, shape index: {}]
  %s5 = inlined_call_operand.hbm [shape: bf16[256,128], index: 5, kind: input, shape index: {}]
  %s6 = inlined_call_operand.vmem [shape: f32[1,128], index: 6, kind: input, shape index: {}]
  %s7 = inlined_call_operand.hbm [shape: bf16[8,128], index: 7, kind: output, shape index: {}]
  %s8 = sld [smem:[#allocation0]]
  $region54: #{tpu_custom_call.1} parent=0
    _
  %s10 = ssub.s32 1, %s8
  %s11 = scalar_select 0, %s10, %s8
  $region1: #{tpu_custom_call.1} parent=0
    #allocation2 [shape = 'u8[4096]{0}', space=vmem, size = 0x1000, scoped, tag = 'input window, operand 0, single buffered']
    #allocation3 [shape = 's32[1]{0}', space=sflag, size = 0x4, scoped, tag = 'scoped memory for tpu_custom_call.1']
    #allocation4 [shape = 's32[1]{0}', space=sflag, size = 0x4, scoped, tag = 'scoped memory for tpu_custom_call.1']
    #allocation5 [shape = 'u8[4096]{0}', space=vmem, size = 0x1000, scoped, tag = 'input window, operand 1, single buffered']
    #allocation6 [shape = 's32[1]{0}', space=sflag, size = 0x4, scoped, tag = 'scoped memory for tpu_custom_call.1']
    #allocation7 [shape = 'u8[65536]{0}', space=vmem, size = 0x10000, scoped, tag = 'input window, operand 3, single buffered']
    #allocation8 [shape = 'u8[65536]{0}', space=vmem, size = 0x10000, scoped, tag = 'input window, operand 5, single buffered']
    #allocation9 [shape = 's32[1]{0}', space=sflag, size = 0x4, scoped, tag = 'scoped memory for tpu_custom_call.1']
    #allocation10 [shape = 'u8[2048]{0}', space=vmem, size = 0x800, scoped, tag = 'output window, operand 0, single buffered']
    %12 = vsyncpa [#allocation3], 0
    %13 = vsyncpa [#allocation6], 0
    %14 = vsyncpa [#allocation9], 0
    %15 = vsyncpa [#allocation4], 0
    // Predicated region
    $region2: #{tpu_custom_call.1} parent=1 // pred_check
      _
    $region3: #{tpu_custom_call.1} parent=1 // pred_check_branch
      %17 = sbr.rel (0) target = $region5
    $region4: #{tpu_custom_call.1} parent=1 // pred_region
      %s19 = ssub.s32 128, 128
      %20 = vsyncadd [#allocation3], %s19
      %s22 = sshll.u32 [#allocation2], 4
      %s23 = int_to_ptr.vmem [resolvable:$true] %s22
      %25 = dma.hbm_to_vmem [thread:$0]  %s0, 128, %s23, [#allocation3]
    $region5: #{tpu_custom_call.1} parent=1 // pred_fallthru
      _
    // Predicated region
    $region6: #{tpu_custom_call.1} parent=1 // pred_check
      _
    $region7: #{tpu_custom_call.1} parent=1 // pred_check_branch
      %27 = sbr.rel (0) target = $region9
    $region8: #{tpu_custom_call.1} parent=1 // pred_region
      %s29 = ssub.s32 128, 128
      %30 = vsyncadd [#allocation6], %s29
      %s31 = sshll.u32 [#allocation5], 4
      %s32 = int_to_ptr.vmem [resolvable:$true] %s31
      %37 = dma.hbm_to_vmem [thread:$0]  %s1, 128, %s32, [#allocation6], 64, 64, 4
    $region9: #{tpu_custom_call.1} parent=1 // pred_fallthru
      _
    // Predicated region
    $region10: #{tpu_custom_call.1} parent=1 // pred_check
      _
    $region11: #{tpu_custom_call.1} parent=1 // pred_check_branch
      %39 = sbr.rel (0) target = $region13
    $region12: #{tpu_custom_call.1} parent=1 // pred_region
      _
    $region13: #{tpu_custom_call.1} parent=1 // pred_fallthru
      _
    // Predicated region
    $region14: #{tpu_custom_call.1} parent=1 // pred_check
      _
    $region15: #{tpu_custom_call.1} parent=1 // pred_check_branch
      %41 = sbr.rel (0) target = $region17
    $region16: #{tpu_custom_call.1} parent=1 // pred_region
      %s43 = ssub.s32 2048, 2048
      %44 = vsyncadd [#allocation6], %s43
      %s45 = sshll.u32 [#allocation7], 4
      %s46 = int_to_ptr.vmem [resolvable:$true] %s45
      %51 = dma.hbm_to_vmem [thread:$0]  %s3, 2048, %s46, [#allocation6], 128, 128, 8
    $region17: #{tpu_custom_call.1} parent=1 // pred_fallthru
      _
    // Predicated region
    $region18: #{tpu_custom_call.1} parent=1 // pred_check
      _
    $region19: #{tpu_custom_call.1} parent=1 // pred_check_branch
      %53 = sbr.rel (0) target = $region21
    $region20: #{tpu_custom_call.1} parent=1 // pred_region
      _
    $region21: #{tpu_custom_call.1} parent=1 // pred_fallthru
      _
    // Predicated region
    $region22: #{tpu_custom_call.1} parent=1 // pred_check
      _
    $region23: #{tpu_custom_call.1} parent=1 // pred_check_branch
      %55 = sbr.rel (0) target = $region25
    $region24: #{tpu_custom_call.1} parent=1 // pred_region
      %s57 = ssub.s32 2048, 2048
      %58 = vsyncadd [#allocation9], %s57
      %s59 = sshll.u32 [#allocation8], 4
      %s60 = int_to_ptr.vmem [resolvable:$true] %s59
      %65 = dma.hbm_to_vmem [thread:$0]  %s5, 2048, %s60, [#allocation9], 64, 64, 4
    $region25: #{tpu_custom_call.1} parent=1 // pred_fallthru
      _
    // Predicated region
    $region26: #{tpu_custom_call.1} parent=1 // pred_check
      _
    $region27: #{tpu_custom_call.1} parent=1 // pred_check_branch
      %67 = sbr.rel (0) target = $region29
    $region28: #{tpu_custom_call.1} parent=1 // pred_region
      _
    $region29: #{tpu_custom_call.1} parent=1 // pred_fallthru
      _
    // Predicated region
    $region30: #{tpu_custom_call.1} parent=1 // pred_check
      _
    $region31: #{tpu_custom_call.1} parent=1 // pred_check_branch
      %69 = sbr.rel (0) target = $region33
    $region32: #{tpu_custom_call.1} parent=1 // pred_region
      %70 = dma.done [#allocation3], 128
    $region33: #{tpu_custom_call.1} parent=1 // pred_fallthru
      _
    // Predicated region
    $region34: #{tpu_custom_call.1} parent=1 // pred_check
      _
    $region35: #{tpu_custom_call.1} parent=1 // pred_check_branch
      %72 = sbr.rel (0) target = $region37
    $region36: #{tpu_custom_call.1} parent=1 // pred_region
      %73 = dma.done [#allocation6], 128
    $region37: #{tpu_custom_call.1} parent=1 // pred_fallthru
      _
    // Predicated region
    $region38: #{tpu_custom_call.1} parent=1 // pred_check
      _
    $region39: #{tpu_custom_call.1} parent=1 // pred_check_branch
      %75 = sbr.rel (0) target = $region41
    $region40: #{tpu_custom_call.1} parent=1 // pred_region
      %76 = dma.done [#allocation6], 2048
    $region41: #{tpu_custom_call.1} parent=1 // pred_fallthru
      _
    // Predicated region
    $region42: #{tpu_custom_call.1} parent=1 // pred_check
      _
    $region43: #{tpu_custom_call.1} parent=1 // pred_check_branch
      %78 = sbr.rel (0) target = $region45
    $region44: #{tpu_custom_call.1} parent=1 // pred_region
      %79 = dma.done [#allocation9], 2048
    $region45: #{tpu_custom_call.1} parent=1 // pred_fallthru
      _
    %v81 = vld [vmem:[#allocation2] sm:$0xff]
    %v82 = vpack.c.bf16 %v81, %v81
    %v83 = vld [vmem:[#allocation5] sm:$0xf]
    %v84 = vld [vmem:[#allocation5 + $0x4] sm:$0xf]
    %v85 = vld [vmem:[%s2] sm:$0x1]
    %v87 = vlaneseq
    %v88 = vshrl.u32 %v87, 7
    %v89 = vsub.s32 0, %v88
    %v90 = vrot.slane %v85, %v89
    %v94 = vunpack.c.l.b16 %v83
    %v95 = vunpack.c.l.b16 %v84
    %v96 = vpack.c.b16 %v95, %v94
    %vm98 = vcmask 130048
    %v100 = vsel %vm98, %v82, 0
    %102 = vmatprep.subr.bf16.mxu0 0
    %103 = vmatpush1.bf16.msra.mxu0 %v96
    %104 = vmatprep.subr.bf16.mxu0 0
    %105 = vmatpush1.bf16.msra.mxu0 0
    %106 = vmatprep.subr.bf16.mxu0 0
    %107 = vmatpush1.bf16.msra.mxu0 0
    %108 = vmatprep.subr.bf16.mxu0 0
    %109 = vmatpush1.bf16.msra.mxu0 0
    %110 = vmatprep.subr.bf16.mxu0 0
    %111 = vmatpush1.bf16.msra.mxu0 0
    %112 = vmatprep.subr.bf16.mxu0 0
    %113 = vmatpush1.bf16.msra.mxu0 0
    %114 = vmatprep.subr.bf16.mxu0 0
    %115 = vmatpush1.bf16.msra.mxu0 0
    %116 = vmatprep.subr.bf16.mxu0 0
    %117 = vmatpush1.bf16.msra.mxu0 0
    %118 = vmatprep.subr.bf16.mxu0 0
    %119 = vmatpush1.bf16.msra.mxu0 0
    %120 = vmatprep.subr.bf16.mxu0 0
    %121 = vmatpush1.bf16.msra.mxu0 0
    %122 = vmatprep.subr.bf16.mxu0 0
    %123 = vmatpush1.bf16.msra.mxu0 0
    %124 = vmatprep.subr.bf16.mxu0 0
    %125 = vmatpush1.bf16.msra.mxu0 0
    %126 = vmatprep.subr.bf16.mxu0 0
    %127 = vmatpush1.bf16.msra.mxu0 0
    %128 = vmatprep.subr.bf16.mxu0 0
    %129 = vmatpush1.bf16.msra.mxu0 0
    %130 = vmatprep.subr.bf16.mxu0 0
    %131 = vmatpush1.bf16.msra.mxu0 0
    %132 = vmatprep.subr.bf16.mxu0 0
    %133 = vmatpush1.bf16.msra.mxu0 0
    %134 = vmatprep.mubr.bf16.mxu0 0
    %135 = vmatmul.mubr.bf16.gmra.mrb[0].mxu0 %v100
    %v136 = vpop.f32.mrb[0].mxu0
    %v137 = vadd.f32 %v90, %v136
    %v138 = vpop.f32.mrb[0].mxu0
    %v139 = vpop.f32.mrb[0].mxu0
    %v140 = vpop.f32.mrb[0].mxu0
    %141 = vdwg.mxu0
    %v142 = vmax.f32 %v137, 0.0
    %v143 = vpack.c.bf16 %v142, %v142
    %v144 = vld [vmem:[#allocation7] sm:$0xff]
    %v145 = vld [vmem:[#allocation7 + $0x8] sm:$0xff]
    %v146 = vld [vmem:[#allocation7 + $0x10] sm:$0xff]
    %v147 = vld [vmem:[#allocation7 + $0x18] sm:$0xff]
    %v148 = vld [vmem:[#allocation7 + $0x20] sm:$0xff]
    %v149 = vld [vmem:[#allocation7 + $0x28] sm:$0xff]
    %v150 = vld [vmem:[#allocation7 + $0x30] sm:$0xff]
    %v151 = vld [vmem:[#allocation7 + $0x38] sm:$0xff]
    %v152 = vld [vmem:[#allocation7 + $0x40] sm:$0xff]
    %v153 = vld [vmem:[#allocation7 + $0x48] sm:$0xff]
    %v154 = vld [vmem:[#allocation7 + $0x50] sm:$0xff]
    %v155 = vld [vmem:[#allocation7 + $0x58] sm:$0xff]
    %v156 = vld [vmem:[#allocation7 + $0x60] sm:$0xff]
    %v157 = vld [vmem:[#allocation7 + $0x68] sm:$0xff]
    %v158 = vld [vmem:[#allocation7 + $0x70] sm:$0xff]
    %v159 = vld [vmem:[#allocation7 + $0x78] sm:$0xff]
    %v160 = vld [vmem:[%s4] sm:$0x3]
    %v162 = vlaneseq
    %v163 = vshrl.u32 %v162, 7
    %v164 = vsub.s32 0, %v163
    %v165 = vrot.slane %v160, %v164
    %v166 = vlaneseq
    %v167 = vshrl.u32 %v166, 7
    %v168 = vsub.s32 1, %v167
    %v169 = vrot.slane %v160, %v168
    %v188 = vunpack.c.l.b16 %v144
    %v189 = vunpack.c.h.b16 %v144
    %v190 = vunpack.c.l.b16 %v145
    %v191 = vunpack.c.h.b16 %v145
    %v192 = vunpack.c.l.b16 %v146
    %v193 = vunpack.c.h.b16 %v146
    %v194 = vunpack.c.l.b16 %v147
    %v195 = vunpack.c.h.b16 %v147
    %v196 = vunpack.c.l.b16 %v148
    %v197 = vunpack.c.h.b16 %v148
    %v198 = vunpack.c.l.b16 %v149
    %v199 = vunpack.c.h.b16 %v149
    %v200 = vunpack.c.l.b16 %v150
    %v201 = vunpack.c.h.b16 %v150
    %v202 = vunpack.c.l.b16 %v151
    %v203 = vunpack.c.h.b16 %v151
    %v204 = vunpack.c.l.b16 %v152
    %v205 = vunpack.c.h.b16 %v152
    %v206 = vunpack.c.l.b16 %v153
    %v207 = vunpack.c.h.b16 %v153
    %v208 = vunpack.c.l.b16 %v154
    %v209 = vunpack.c.h.b16 %v154
    %v210 = vunpack.c.l.b16 %v155
    %v211 = vunpack.c.h.b16 %v155
    %v212 = vunpack.c.l.b16 %v156
    %v213 = vunpack.c.h.b16 %v156
    %v214 = vunpack.c.l.b16 %v157
    %v215 = vunpack.c.h.b16 %v157
    %v216 = vunpack.c.l.b16 %v158
    %v217 = vunpack.c.h.b16 %v158
    %v218 = vunpack.c.l.b16 %v159
    %v219 = vunpack.c.h.b16 %v159
    %v220 = vpack.c.b16 %v190, %v188
    %v221 = vpack.c.b16 %v191, %v189
    %v222 = vpack.c.b16 %v194, %v192
    %v223 = vpack.c.b16 %v195, %v193
    %v224 = vpack.c.b16 %v198, %v196
    %v225 = vpack.c.b16 %v199, %v197
    %v226 = vpack.c.b16 %v202, %v200
    %v227 = vpack.c.b16 %v203, %v201
    %v228 = vpack.c.b16 %v206, %v204
    %v229 = vpack.c.b16 %v207, %v205
    %v230 = vpack.c.b16 %v210, %v208
    %v231 = vpack.c.b16 %v211, %v209
    %v232 = vpack.c.b16 %v214, %v212
    %v233 = vpack.c.b16 %v215, %v213
    %v234 = vpack.c.b16 %v218, %v216
    %v235 = vpack.c.b16 %v219, %v217
    %252 = vmatprep.subr.bf16.mxu0 %v221
    %253 = vmatpush1.bf16.msra.mxu0 %v220
    %254 = vmatprep.subr.bf16.mxu0 %v223
    %255 = vmatpush1.bf16.msra.mxu0 %v222
    %256 = vmatprep.subr.bf16.mxu0 %v225
    %257 = vmatpush1.bf16.msra.mxu0 %v224
    %258 = vmatprep.subr.bf16.mxu0 %v227
    %259 = vmatpush1.bf16.msra.mxu0 %v226
    %260 = vmatprep.subr.bf16.mxu0 %v229
    %261 = vmatpush1.bf16.msra.mxu0 %v228
    %262 = vmatprep.subr.bf16.mxu0 %v231
    %263 = vmatpush1.bf16.msra.mxu0 %v230
    %264 = vmatprep.subr.bf16.mxu0 %v233
    %265 = vmatpush1.bf16.msra.mxu0 %v232
    %266 = vmatprep.subr.bf16.mxu0 %v235
    %267 = vmatpush1.bf16.msra.mxu0 %v234
    %268 = vmatprep.subr.bf16.mxu0 0
    %269 = vmatpush1.bf16.msra.mxu0 0
    %270 = vmatprep.subr.bf16.mxu0 0
    %271 = vmatpush1.bf16.msra.mxu0 0
    %272 = vmatprep.subr.bf16.mxu0 0
    %273 = vmatpush1.bf16.msra.mxu0 0
    %274 = vmatprep.subr.bf16.mxu0 0
    %275 = vmatpush1.bf16.msra.mxu0 0
    %276 = vmatprep.subr.bf16.mxu0 0
    %277 = vmatpush1.bf16.msra.mxu0 0
    %278 = vmatprep.subr.bf16.mxu0 0
    %279 = vmatpush1.bf16.msra.mxu0 0
    %280 = vmatprep.subr.bf16.mxu0 0
    %281 = vmatpush1.bf16.msra.mxu0 0
    %282 = vmatprep.subr.bf16.mxu0 0
    %283 = vmatpush1.bf16.msra.mxu0 0
    %284 = vmatprep.mubr.bf16.mxu0 0
    %285 = vmatmul.mubr.bf16.gmra.mrb[0].mxu0 %v143
    %v286 = vpop.f32.mrb[0].mxu0
    %v287 = vadd.f32 %v165, %v286
    %v288 = vpop.f32.mrb[0].mxu0
    %v289 = vadd.f32 %v169, %v288
    %v290 = vpop.f32.mrb[0].mxu0
    %v291 = vpop.f32.mrb[0].mxu0
    %292 = vdwg.mxu0
    %v293 = vmax.f32 %v287, 0.0
    %v294 = vmax.f32 %v289, 0.0
    %v295 = vpack.c.bf16 %v293, %v293
    %v296 = vpack.c.bf16 %v294, %v294
    %v297 = vld [vmem:[#allocation8] sm:$0xf]
    %v298 = vld [vmem:[#allocation8 + $0x4] sm:$0xf]
    %v299 = vld [vmem:[#allocation8 + $0x8] sm:$0xf]
    %v300 = vld [vmem:[#allocation8 + $0xc] sm:$0xf]
    %v301 = vld [vmem:[#allocation8 + $0x10] sm:$0xf]
    %v302 = vld [vmem:[#allocation8 + $0x14] sm:$0xf]
    %v303 = vld [vmem:[#allocation8 + $0x18] sm:$0xf]
    %v304 = vld [vmem:[#allocation8 + $0x1c] sm:$0xf]
    %v305 = vld [vmem:[#allocation8 + $0x20] sm:$0xf]
    %v306 = vld [vmem:[#allocation8 + $0x24] sm:$0xf]
    %v307 = vld [vmem:[#allocation8 + $0x28] sm:$0xf]
    %v308 = vld [vmem:[#allocation8 + $0x2c] sm:$0xf]
    %v309 = vld [vmem:[#allocation8 + $0x30] sm:$0xf]
    %v310 = vld [vmem:[#allocation8 + $0x34] sm:$0xf]
    %v311 = vld [vmem:[#allocation8 + $0x38] sm:$0xf]
    %v312 = vld [vmem:[#allocation8 + $0x3c] sm:$0xf]
    %v313 = vld [vmem:[#allocation8 + $0x40] sm:$0xf]
    %v314 = vld [vmem:[#allocation8 + $0x44] sm:$0xf]
    %v315 = vld [vmem:[#allocation8 + $0x48] sm:$0xf]
    %v316 = vld [vmem:[#allocation8 + $0x4c] sm:$0xf]
    %v317 = vld [vmem:[#allocation8 + $0x50] sm:$0xf]
    %v318 = vld [vmem:[#allocation8 + $0x54] sm:$0xf]
    %v319 = vld [vmem:[#allocation8 + $0x58] sm:$0xf]
    %v320 = vld [vmem:[#allocation8 + $0x5c] sm:$0xf]
    %v321 = vld [vmem:[#allocation8 + $0x60] sm:$0xf]
    %v322 = vld [vmem:[#allocation8 + $0x64] sm:$0xf]
    %v323 = vld [vmem:[#allocation8 + $0x68] sm:$0xf]
    %v324 = vld [vmem:[#allocation8 + $0x6c] sm:$0xf]
    %v325 = vld [vmem:[#allocation8 + $0x70] sm:$0xf]
    %v326 = vld [vmem:[#allocation8 + $0x74] sm:$0xf]
    %v327 = vld [vmem:[#allocation8 + $0x78] sm:$0xf]
    %v328 = vld [vmem:[#allocation8 + $0x7c] sm:$0xf]
    %v329 = vld [vmem:[%s6] sm:$0x1]
    %v331 = vlaneseq
    %v332 = vshrl.u32 %v331, 7
    %v333 = vsub.s32 0, %v332
    %v334 = vrot.slane %v329, %v333
    %v368 = vunpack.c.l.b16 %v297
    %v369 = vunpack.c.l.b16 %v298
    %v370 = vunpack.c.l.b16 %v299
    %v371 = vunpack.c.l.b16 %v300
    %v372 = vunpack.c.l.b16 %v301
    %v373 = vunpack.c.l.b16 %v302
    %v374 = vunpack.c.l.b16 %v303
    %v375 = vunpack.c.l.b16 %v304
    %v376 = vunpack.c.l.b16 %v305
    %v377 = vunpack.c.l.b16 %v306
    %v378 = vunpack.c.l.b16 %v307
    %v379 = vunpack.c.l.b16 %v308
    %v380 = vunpack.c.l.b16 %v309
    %v381 = vunpack.c.l.b16 %v310
    %v382 = vunpack.c.l.b16 %v311
    %v383 = vunpack.c.l.b16 %v312
    %v384 = vunpack.c.l.b16 %v313
    %v385 = vunpack.c.l.b16 %v314
    %v386 = vunpack.c.l.b16 %v315
    %v387 = vunpack.c.l.b16 %v316
    %v388 = vunpack.c.l.b16 %v317
    %v389 = vunpack.c.l.b16 %v318
    %v390 = vunpack.c.l.b16 %v319
    %v391 = vunpack.c.l.b16 %v320
    %v392 = vunpack.c.l.b16 %v321
    %v393 = vunpack.c.l.b16 %v322
    %v394 = vunpack.c.l.b16 %v323
    %v395 = vunpack.c.l.b16 %v324
    %v396 = vunpack.c.l.b16 %v325
    %v397 = vunpack.c.l.b16 %v326
    %v398 = vunpack.c.l.b16 %v327
    %v399 = vunpack.c.l.b16 %v328
    %v400 = vpack.c.b16 %v369, %v368
    %v401 = vpack.c.b16 %v371, %v370
    %v402 = vpack.c.b16 %v373, %v372
    %v403 = vpack.c.b16 %v375, %v374
    %v404 = vpack.c.b16 %v377, %v376
    %v405 = vpack.c.b16 %v379, %v378
    %v406 = vpack.c.b16 %v381, %v380
    %v407 = vpack.c.b16 %v383, %v382
    %v408 = vpack.c.b16 %v385, %v384
    %v409 = vpack.c.b16 %v387, %v386
    %v410 = vpack.c.b16 %v389, %v388
    %v411 = vpack.c.b16 %v391, %v390
    %v412 = vpack.c.b16 %v393, %v392
    %v413 = vpack.c.b16 %v395, %v394
    %v414 = vpack.c.b16 %v397, %v396
    %v415 = vpack.c.b16 %v399, %v398
    %432 = vmatprep.subr.bf16.mxu0 0
    %433 = vmatpush1.bf16.msra.mxu0 %v400
    %434 = vmatprep.subr.bf16.mxu0 0
    %435 = vmatpush1.bf16.msra.mxu0 %v401
    %436 = vmatprep.subr.bf16.mxu0 0
    %437 = vmatpush1.bf16.msra.mxu0 %v402
    %438 = vmatprep.subr.bf16.mxu0 0
    %439 = vmatpush1.bf16.msra.mxu0 %v403
    %440 = vmatprep.subr.bf16.mxu0 0
    %441 = vmatpush1.bf16.msra.mxu0 %v404
    %442 = vmatprep.subr.bf16.mxu0 0
    %443 = vmatpush1.bf16.msra.mxu0 %v405
    %444 = vmatprep.subr.bf16.mxu0 0
    %445 = vmatpush1.bf16.msra.mxu0 %v406
    %446 = vmatprep.subr.bf16.mxu0 0
    %447 = vmatpush1.bf16.msra.mxu0 %v407
    %448 = vmatprep.subr.bf16.mxu0 0
    %449 = vmatpush1.bf16.msra.mxu0 %v408
    %450 = vmatprep.subr.bf16.mxu0 0
    %451 = vmatpush1.bf16.msra.mxu0 %v409
    %452 = vmatprep.subr.bf16.mxu0 0
    %453 = vmatpush1.bf16.msra.mxu0 %v410
    %454 = vmatprep.subr.bf16.mxu0 0
    %455 = vmatpush1.bf16.msra.mxu0 %v411
    %456 = vmatprep.subr.bf16.mxu0 0
    %457 = vmatpush1.bf16.msra.mxu0 %v412
    %458 = vmatprep.subr.bf16.mxu0 0
    %459 = vmatpush1.bf16.msra.mxu0 %v413
    %460 = vmatprep.subr.bf16.mxu0 0
    %461 = vmatpush1.bf16.msra.mxu0 %v414
    %462 = vmatprep.subr.bf16.mxu0 0
    %463 = vmatpush1.bf16.msra.mxu0 %v415
    %464 = vmatprep.mubr.bf16.mxu0 %v296
    %465 = vmatmul.mubr.bf16.gmra.mrb[0].mxu0 %v295
    %v466 = vpop.f32.mrb[0].mxu0
    %v467 = vadd.f32 %v334, %v466
    %v468 = vpop.f32.mrb[0].mxu0
    %v469 = vpop.f32.mrb[0].mxu0
    %v470 = vpop.f32.mrb[0].mxu0
    %471 = vdwg.mxu0
    %v472 = vpack.c.bf16 %v467, %v467
    %473 = vst [vmem:[#allocation10] sm:$0xf] %v472
    // Predicated region
    $region46: #{tpu_custom_call.1} parent=1 // pred_check
      _
    $region47: #{tpu_custom_call.1} parent=1 // pred_check_branch
      %475 = sbr.rel (0) target = $region49
    $region48: #{tpu_custom_call.1} parent=1 // pred_region
      %s477 = ssub.s32 64, 64
      %478 = vsyncadd [#allocation4], %s477
      %s480 = sshll.u32 [#allocation10], 4
      %s481 = int_to_ptr.vmem [resolvable:$true] %s480
      %483 = dma.vmem_to_hbm [thread:$0]  %s481, 64, %s7, [#allocation4]
    $region49: #{tpu_custom_call.1} parent=1 // pred_fallthru
      _
    // Predicated region
    $region50: #{tpu_custom_call.1} parent=1 // pred_check
      _
    $region51: #{tpu_custom_call.1} parent=1 // pred_check_branch
      %485 = sbr.rel (0) target = $region53
    $region52: #{tpu_custom_call.1} parent=1 // pred_region
      %486 = dma.done [#allocation4], 64
    $region53: #{tpu_custom_call.1} parent=1 // pred_fallthru
      _
    %487 = vsyncpa [#allocation3], 1
    %488 = vsyncpa [#allocation6], 1
    %489 = vsyncpa [#allocation9], 1
    %490 = vsyncpa [#allocation4], 1

</llo_original>
